<compile_context>
chip_gen: v6e
topology: v6e:2x2x1
jax: 0.10.0
libtpu: 0.0.40
codegen_flags: <defaults>
</compile_context>

<pallas_src>
import jax
import jax.numpy as jnp
from jax.experimental import pallas as pl
from jax.experimental.pallas import tpu as pltpu


def _identity_kernel(x_ref, o_ref):
    # Pure pass-through of the current block.
    o_ref[...] = x_ref[...]


def empty_layer_forward(x: jax.Array) -> jax.Array:
    """Faithful EmptyLayer: the layer performs no computation.

    Fastest correct implementation (review item #1): return the input as-is.
    """
    return x


def empty_layer_forward_pallas(x: jax.Array) -> jax.Array:
    """Identity pass-through as an explicit Pallas op boundary.

    Lane-dense layout + aliased output; no grid for small tensors, a 1-D grid
    of large (tile_rows x 128) tiles for large tensors.
    """
    total = x.size
    if total % 128 == 0:
        rows = total // 128
        flat = x.reshape(rows, 128)          # lane-dense: 128-wide last dim
    else:
        # TODO(synk): non-128-divisible sizes fall back to a single full-array
        # block (block == full dims satisfies the tiling rule).
        rows = 1
        flat = x.reshape(1, total)

    small_row_limit = 4096  # <= 2 MiB f32: one block, no grid (review item #4)

    if rows <= small_row_limit:
        out = pl.pallas_call(
            _identity_kernel,
            out_shape=jax.ShapeDtypeStruct(flat.shape, flat.dtype),
            in_specs=[pl.BlockSpec(flat.shape, lambda: (0, 0))],
            out_specs=pl.BlockSpec(flat.shape, lambda: (0, 0)),
            input_output_aliases={0: 0},     # output is the donated input buffer
        )(flat)
    else:
        # Large tensors: big lane-dense row tiles, 1-D parallel grid.
        # 1024 x 128 f32 = 512 KiB/tile; 4x resident (in+out, double-buffered)
        # stays well under scoped VMEM on v5e/v6e/v7x.
        tile_rows = 1024
        out = pl.pallas_call(
            _identity_kernel,
            out_shape=jax.ShapeDtypeStruct(flat.shape, flat.dtype),
            grid=(pl.cdiv(rows, tile_rows),),
            in_specs=[pl.BlockSpec((tile_rows, 128), lambda i: (i, 0))],
            out_specs=pl.BlockSpec((tile_rows, 128), lambda i: (i, 0)),
            input_output_aliases={0: 0},
            compiler_params=pltpu.CompilerParams(
                dimension_semantics=("parallel",)
            ),
        )(flat)

    return out.reshape(x.shape)


if __name__ == "__main__":
    key = jax.random.PRNGKey(0)
    # Small NCHW input consistent with a darknet feature map.
    x = jax.random.normal(key, (2, 4, 16, 16), dtype=jnp.float32)

    # Preferred path: EmptyLayer compiles to nothing — returns the input.
    y_fast = empty_layer_forward(x)
    assert y_fast is x

    # Explicit Pallas op-boundary variant (run once, as required).
    y = empty_layer_forward_pallas(x)
    y = jax.block_until_ready(y)

    # EmptyLayer.forward has no compute; identity pass-through must be exact.
    assert y.shape == x.shape and y.dtype == x.dtype
    assert bool(jnp.all(y == x))

    print("KERNEL_OK")
</pallas_src>

<mosaic_0001>
module attributes {stable_mosaic.version = 11 : i64} {
  func.func @_identity_kernel(%arg0: memref<16x128xf32, #tpu.memory_space<vmem>>, %arg1: memref<16x128xf32, #tpu.memory_space<vmem>>) attributes {dimension_semantics = [], scalar_prefetch = 0 : i64, scratch_operands = 0 : i64, tpu.core_type = #tpu.core_type<tc>} {
    %c0 = arith.constant 0 : index
    %c0_0 = arith.constant 0 : index
    %0 = vector.load %arg0[%c0, %c0_0] : memref<16x128xf32, #tpu.memory_space<vmem>>, vector<16x128xf32>
    %c0_1 = arith.constant 0 : index
    %c0_2 = arith.constant 0 : index
    %1 = vector.load %arg1[%c0_1, %c0_2] : memref<16x128xf32, #tpu.memory_space<vmem>>, vector<16x128xf32>
    tpu.vector_store %arg1[%c0_1, %c0_2], %0 {strides = array<i32>} : memref<16x128xf32, #tpu.memory_space<vmem>>, vector<16x128xf32>,
    return
  }
}

</mosaic_0001>

<llo_original>
// kernel: tpu_custom_call.1
$region0: #{tpu_custom_call.1}
  #allocation0 [shape = 'u32[]', space=smem, size = 0x4, offset = 0x4, fixed_abs, tag = 'smem constant byte address 0x4 - core index']
  #allocation1 [shape = 'u32[144,128]{1,0:T(1,128)}', space=vmem, size = 0x12000, scoped, tag = 'internal scratch']
  %s0 = inlined_call_operand.hbm [shape: f32[16,128], index: 0, kind: input, shape index: {}, may-alias: {0,1}]
  %s1 = inlined_call_operand.hbm [shape: f32[16,128], index: 1, kind: output, shape index: {}, may-alias: {0,1}]
  %s2 = sld [smem:[#allocation0]]
  $region18: #{tpu_custom_call.1} parent=0
    _
  %s4 = ssub.s32 1, %s2
  %s5 = scalar_select 0, %s4, %s2
  $region1: #{tpu_custom_call.1} parent=0
    #allocation2 [shape = 'u8[8192]{0}', space=vmem, size = 0x2000, scoped, tag = 'input window, operand 0, single buffered']
    #allocation3 [shape = 's32[1]{0}', space=sflag, size = 0x4, scoped, tag = 'scoped memory for tpu_custom_call.1']
    #allocation4 [shape = 's32[1]{0}', space=sflag, size = 0x4, scoped, tag = 'scoped memory for tpu_custom_call.1']
    #allocation5 [shape = 'u8[8192]{0}', space=vmem, size = 0x2000, scoped, tag = 'output window, operand 0, single buffered']
    %6 = vsyncpa [#allocation3], 0
    %7 = vsyncpa [#allocation4], 0
    // Predicated region
    $region2: #{tpu_custom_call.1} parent=1 // pred_check
      _
    $region3: #{tpu_custom_call.1} parent=1 // pred_check_branch
      %9 = sbr.rel (0) target = $region5
    $region4: #{tpu_custom_call.1} parent=1 // pred_region
      %s11 = ssub.s32 256, 256
      %12 = vsyncadd [#allocation3], %s11
      %s13 = sshll.u32 [#allocation2], 4
      %s14 = int_to_ptr.vmem [resolvable:$true] %s13
      %19 = dma.hbm_to_vmem [thread:$0]  %s0, 256, %s14, [#allocation3], 128, 128, 8
    $region5: #{tpu_custom_call.1} parent=1 // pred_fallthru
      _
    // Predicated region
    $region6: #{tpu_custom_call.1} parent=1 // pred_check
      _
    $region7: #{tpu_custom_call.1} parent=1 // pred_check_branch
      %21 = sbr.rel (0) target = $region9
    $region8: #{tpu_custom_call.1} parent=1 // pred_region
      %22 = dma.done [#allocation3], 256
    $region9: #{tpu_custom_call.1} parent=1 // pred_fallthru
      _
    %v23 = vld [vmem:[#allocation2] sm:$0xff]
    %v24 = vld [vmem:[#allocation2 + $0x8] sm:$0xff]
    %25 = vst [vmem:[#allocation5] sm:$0xff] %v23
    %26 = vst [vmem:[#allocation5 + $0x8] sm:$0xff] %v24
    // Predicated region
    $region10: #{tpu_custom_call.1} parent=1 // pred_check
      _
    $region11: #{tpu_custom_call.1} parent=1 // pred_check_branch
      %28 = sbr.rel (0) target = $region13
    $region12: #{tpu_custom_call.1} parent=1 // pred_region
      %s30 = ssub.s32 256, 256
      %31 = vsyncadd [#allocation4], %s30
      %s32 = sshll.u32 [#allocation5], 4
      %s33 = int_to_ptr.vmem [resolvable:$true] %s32
      %38 = dma.vmem_to_hbm [thread:$0]  %s33, 256, %s1, [#allocation4], 128, 128, 8
    $region13: #{tpu_custom_call.1} parent=1 // pred_fallthru
      _
    // Predicated region
    $region14: #{tpu_custom_call.1} parent=1 // pred_check
      _
    $region15: #{tpu_custom_call.1} parent=1 // pred_check_branch
      %40 = sbr.rel (0) target = $region17
    $region16: #{tpu_custom_call.1} parent=1 // pred_region
      %41 = dma.done [#allocation4], 256
    $region17: #{tpu_custom_call.1} parent=1 // pred_fallthru
      _
    %42 = vsyncpa [#allocation3], 1
    %43 = vsyncpa [#allocation4], 1

</llo_original>
